<compile_context>
chip_gen: v7x
topology: tpu7x:2x2x1
jax: 0.10.0
libtpu: 0.0.40
codegen_flags: <defaults>
</compile_context>

<pallas_src>
import functools

import jax
import jax.numpy as jnp
from jax.experimental import pallas as pl
from jax.experimental.pallas import tpu as pltpu


def mutual_attn_kernel(src_ref, tgt_ref,
                       wa_ref, ba_ref,      # block-diag convA: (tb*c_m, tb*C), (tb*c_m, 1)
                       wb_ref, bb_ref,      # block-diag convB: (tb*c_n, tb*C), (tb*c_n, 1)
                       mt_ref, u_ref,       # folded linear/linearS/linearT: (c_m, C+1), (1, C+1)
                       out_ref,
                       *, c_m, c_n, n_ch, seq_len, batch_tile):
    tb, C, L = batch_tile, n_ch, seq_len

    T3 = tgt_ref[...].astype(jnp.float32)                          # (tb, C, L)
    X2 = src_ref[...].astype(jnp.float32).reshape(tb * C, L)       # free leading-dim merge

    # ---- both 1x1 convs for the whole batch tile: two 2-D MXU matmuls ----
    A2 = jnp.dot(wa_ref[...], X2, preferred_element_type=jnp.float32) + ba_ref[...]   # (tb*c_m, L)
    B2 = jnp.dot(wb_ref[...], X2, preferred_element_type=jnp.float32) + bb_ref[...]   # (tb*c_n, L)

    # ---- row-wise softmax over the sequence axis (dim=-1) ----
    B2 = B2 - jnp.max(B2, axis=-1, keepdims=True)
    E = jnp.exp(B2)
    att2 = E / jnp.sum(E, axis=-1, keepdims=True)                  # (tb*c_n, L)

    # ---- gd = mean_{c_n}(A @ att^T) via the mean-commute identity ----
    s = jnp.sum(att2.reshape(tb, c_n, L), axis=1, keepdims=True)   # (tb, 1, L)
    A3 = A2.reshape(tb, c_m, L)                                    # free leading-dim split
    gd = jnp.sum(A3 * s, axis=-1) * (1.0 / c_n)                    # (tb, c_m)

    # ---- folded (linearT^T o linearS o bipool.linear) on all batches: one matmul ----
    V = jnp.dot(gd, mt_ref[...], preferred_element_type=jnp.float32) + u_ref[...]     # (tb, C+1)
    v = V[:, :C]                                                   # (tb, C)
    const = V[:, C:]                                               # (tb, 1)

    # ---- rank-1 attention logits for the whole tile ----
    logits = jnp.sum(T3 * v[:, :, None], axis=1) + const           # (tb, L)
    amap = jax.nn.sigmoid(logits)                                  # (tb, L)

    # out = relu(target + target * att_map), single slab-wide store
    out_ref[...] = jnp.maximum(T3 * (1.0 + amap[:, None, :]), 0.0).astype(out_ref.dtype)


def _default_batch_tile(batch, n_ch, seq_len, itemsize):
    """Largest divisor of `batch` that (a) leaves >= 2 grid steps so the
    BlockSpec pipeline overlaps DMA with compute (and both v7x TCs get work),
    and (b) keeps the three double-buffered (tb, C, L) data slabs inside a
    conservative ~8 MiB VMEM budget (safe on v5e/v6e/v7x default scoped VMEM)."""
    if batch <= 1:
        return 1
    budget = 8 * 1024 * 1024
    per_batch = 3 * 2 * n_ch * seq_len * itemsize
    cap = max(1, budget // max(per_batch, 1))
    best = 1
    for tb in range(1, batch // 2 + 1):
        if batch % tb == 0 and tb <= cap:
            best = tb
    return best


def mutual_attentation(source, target, params, *, batch_tile=None):
    """source, target: (B, C, L) float32. Returns (B, C, L)."""
    (wA, bA, wB, bB, wL, bL, wS, bS, wT, bT) = params
    B, C, L = source.shape
    c_m = wA.shape[0]
    c_n = wB.shape[0]

    # ---- trace-time weight folding (pure XLA, happens once, not per step) ----
    wSL = wS @ wL                                        # (att, c_m)
    bSL = wS @ bL + bS                                   # (att, 1)
    M = wT.T @ wSL                                       # (C, c_m)   v = M gd + u
    u = wT.T @ bSL                                       # (C, 1)
    w_c = wSL.T @ bT                                     # (c_m, 1)   const = w_c.gd + c0
    c0 = bSL.T @ bT                                      # (1, 1)
    MT = jnp.concatenate([M, w_c.T], axis=0).T           # (c_m, C+1)
    u_row = jnp.concatenate([u, c0], axis=0).T           # (1, C+1)

    # ---- batch tile selection ----
    if batch_tile is None:
        tb = _default_batch_tile(B, C, L, jnp.dtype(source.dtype).itemsize)
    else:
        tb = int(batch_tile)
        if tb <= 0 or B % tb != 0:
            raise ValueError(
                f"batch_tile={batch_tile} must be a positive divisor of batch={B}")

    # Block-diagonal conv weights: one 2-D MXU matmul per tile per conv.
    eye_tb = jnp.eye(tb, dtype=wA.dtype)
    WbigA = jnp.kron(eye_tb, wA)                          # (tb*c_m, tb*C)
    WbigB = jnp.kron(eye_tb, wB)                          # (tb*c_n, tb*C)
    bbigA = jnp.tile(bA, (tb, 1))                         # (tb*c_m, 1)
    bbigB = jnp.tile(bB, (tb, 1))                         # (tb*c_n, 1)

    # Native (B, C, L) layout; last two block dims equal the full array dims.
    data_spec = pl.BlockSpec((tb, C, L), lambda i: (i, 0, 0))

    def full_spec(arr):
        return pl.BlockSpec(arr.shape, lambda i: (0,) * arr.ndim)

    kernel = functools.partial(mutual_attn_kernel,
                               c_m=c_m, c_n=c_n, n_ch=C, seq_len=L, batch_tile=tb)

    out = pl.pallas_call(
        kernel,
        out_shape=jax.ShapeDtypeStruct((B, C, L), source.dtype),
        grid_spec=pltpu.PrefetchScalarGridSpec(
            num_scalar_prefetch=0,
            grid=(B // tb,),
            in_specs=[data_spec, data_spec,
                      full_spec(WbigA), full_spec(bbigA),
                      full_spec(WbigB), full_spec(bbigB),
                      full_spec(MT), full_spec(u_row)],
            out_specs=data_spec,
        ),
        compiler_params=pltpu.CompilerParams(
            dimension_semantics=("parallel",)),
    )(source, target, WbigA, bbigA, WbigB, bbigB, MT, u_row)

    return out


def reference(source, target, params):
    """Pure-JAX reference mirroring the PyTorch forward (for a sanity check)."""
    (wA, bA, wB, bB, wL, bL, wS, bS, wT, bT) = params

    def per_batch(x, t):
        A = wA @ x + bA                           # (c_m, L)
        Bm = wB @ x + bB                          # (c_n, L)
        att = jax.nn.softmax(Bm, axis=-1)         # (c_n, L)
        gdesc = A @ att.T                         # (c_m, c_n)
        gd = jnp.mean(gdesc, axis=-1)             # (c_m,)
        gd2 = wL @ gd + bL[:, 0]                  # (C,)
        gS = wS @ gd2 + bS[:, 0]                  # (att,)
        tT = wT @ t + bT                          # (att, L)
        logits = gS @ tT                          # (L,)
        amap = jax.nn.sigmoid(logits)[None, :]    # (1, L)
        return jnp.maximum(t + t * amap, 0.0)

    return jax.vmap(per_batch)(source, target)


if __name__ == "__main__":
    # Small shapes consistent with the module.
    B, C, L = 2, 16, 16           # batch, in_channels, seq_len
    att_size, c_m, c_n = 32, 16, 8

    key = jax.random.PRNGKey(0)
    ks = jax.random.split(key, 12)
    scale = 0.1
    dt = jnp.float32

    # Parameters (deterministic, synthetic). Biases kept as 2D columns.
    wA = scale * jax.random.normal(ks[0], (c_m, C), dt)        # convA.weight[:, :, 0]
    bA = scale * jax.random.normal(ks[1], (c_m, 1), dt)
    wB = scale * jax.random.normal(ks[2], (c_n, C), dt)        # convB.weight[:, :, 0]
    bB = scale * jax.random.normal(ks[3], (c_n, 1), dt)
    wL = scale * jax.random.normal(ks[4], (C, c_m), dt)        # bipool.linear
    bL = scale * jax.random.normal(ks[5], (C, 1), dt)
    wS = scale * jax.random.normal(ks[6], (att_size, C), dt)   # linearS
    bS = scale * jax.random.normal(ks[7], (att_size, 1), dt)
    wT = scale * jax.random.normal(ks[8], (att_size, C), dt)   # linearT
    bT = scale * jax.random.normal(ks[9], (att_size, 1), dt)
    params = (wA, bA, wB, bB, wL, bL, wS, bS, wT, bT)

    source = jax.random.normal(ks[10], (B, C, L), dt)
    target = jax.random.normal(ks[11], (B, C, L), dt)

    out = mutual_attentation(source, target, params)
    out = jax.block_until_ready(out)

    ref = jax.block_until_ready(reference(source, target, params))
    assert out.shape == (B, C, L)
    if not jnp.allclose(out, ref, rtol=1e-4, atol=1e-5):
        raise AssertionError("Pallas kernel output mismatch vs reference")

    print("KERNEL_OK")
</pallas_src>

<mosaic_0001>
module attributes {stable_mosaic.version = 11 : i64} {
  func.func @mutual_attn_kernel(%arg0: i32, %arg1: memref<1x16x16xf32, #tpu.memory_space<vmem>>, %arg2: memref<1x16x16xf32, #tpu.memory_space<vmem>>, %arg3: memref<16x16xf32, #tpu.memory_space<vmem>>, %arg4: memref<16x1xf32, #tpu.memory_space<vmem>>, %arg5: memref<8x16xf32, #tpu.memory_space<vmem>>, %arg6: memref<8x1xf32, #tpu.memory_space<vmem>>, %arg7: memref<16x17xf32, #tpu.memory_space<vmem>>, %arg8: memref<1x17xf32, #tpu.memory_space<vmem>>, %arg9: memref<1x16x16xf32, #tpu.memory_space<vmem>>) attributes {dimension_semantics = [#tpu.dimension_semantics<parallel>], iteration_bounds = array<i64: 2>, scalar_prefetch = 0 : i64, scratch_operands = 0 : i64, tpu.core_type = #tpu.core_type<tc>, window_params = [{transform_indices = @transform_0, window_bounds = array<i64: 1, 16, 16>}, {transform_indices = @transform_1, window_bounds = array<i64: 1, 16, 16>}, {pipeline_mode = #tpu.pipeline_mode<synchronous>, transform_indices = @transform_2, window_bounds = array<i64: 16, 16>}, {pipeline_mode = #tpu.pipeline_mode<synchronous>, transform_indices = @transform_3, window_bounds = array<i64: 16, 1>}, {pipeline_mode = #tpu.pipeline_mode<synchronous>, transform_indices = @transform_4, window_bounds = array<i64: 8, 16>}, {pipeline_mode = #tpu.pipeline_mode<synchronous>, transform_indices = @transform_5, window_bounds = array<i64: 8, 1>}, {pipeline_mode = #tpu.pipeline_mode<synchronous>, transform_indices = @transform_6, window_bounds = array<i64: 16, 17>}, {pipeline_mode = #tpu.pipeline_mode<synchronous>, transform_indices = @transform_7, window_bounds = array<i64: 1, 17>}, {transform_indices = @transform_8, window_bounds = array<i64: 1, 16, 16>}]} {
    %c0 = arith.constant 0 : index
    %c0_0 = arith.constant 0 : index
    %c0_1 = arith.constant 0 : index
    %0 = vector.load %arg2[%c0, %c0_0, %c0_1] : memref<1x16x16xf32, #tpu.memory_space<vmem>>, vector<1x16x16xf32>
    %c0_2 = arith.constant 0 : index
    %c0_3 = arith.constant 0 : index
    %c0_4 = arith.constant 0 : index
    %1 = vector.load %arg1[%c0_2, %c0_3, %c0_4] : memref<1x16x16xf32, #tpu.memory_space<vmem>>, vector<1x16x16xf32>
    %2 = vector.shape_cast %1 : vector<1x16x16xf32> to vector<16x16xf32>
    %c0_5 = arith.constant 0 : index
    %c0_6 = arith.constant 0 : index
    %3 = vector.load %arg3[%c0_5, %c0_6] : memref<16x16xf32, #tpu.memory_space<vmem>>, vector<16x16xf32>
    %cst = arith.constant dense<0.000000e+00> : vector<16x16xf32>
    %4 = tpu.matmul %3, %2, %cst {dimension_numbers = #tpu.dot_dimension_numbers<[1], [0], [0], [1], [0, 0, 1, 1], [], []>} : vector<16x16xf32>, vector<16x16xf32>, vector<16x16xf32> -> vector<16x16xf32>
    %c0_7 = arith.constant 0 : index
    %c0_8 = arith.constant 0 : index
    %5 = vector.load %arg4[%c0_7, %c0_8] : memref<16x1xf32, #tpu.memory_space<vmem>>, vector<16x1xf32>
    %6 = vector.broadcast %5 : vector<16x1xf32> to vector<16x16xf32>
    %7 = arith.addf %4, %6 : vector<16x16xf32>
    %c0_9 = arith.constant 0 : index
    %c0_10 = arith.constant 0 : index
    %8 = vector.load %arg5[%c0_9, %c0_10] : memref<8x16xf32, #tpu.memory_space<vmem>>, vector<8x16xf32>
    %cst_11 = arith.constant dense<0.000000e+00> : vector<8x16xf32>
    %9 = tpu.matmul %8, %2, %cst_11 {dimension_numbers = #tpu.dot_dimension_numbers<[1], [0], [0], [1], [0, 0, 1, 1], [], []>} : vector<8x16xf32>, vector<16x16xf32>, vector<8x16xf32> -> vector<8x16xf32>
    %c0_12 = arith.constant 0 : index
    %c0_13 = arith.constant 0 : index
    %10 = vector.load %arg6[%c0_12, %c0_13] : memref<8x1xf32, #tpu.memory_space<vmem>>, vector<8x1xf32>
    %11 = vector.broadcast %10 : vector<8x1xf32> to vector<8x16xf32>
    %12 = arith.addf %9, %11 : vector<8x16xf32>
    %cst_14 = arith.constant dense<0xFF800000> : vector<8xf32>
    %13 = vector.multi_reduction <maximumf>, %12, %cst_14 [1] : vector<8x16xf32> to vector<8xf32>
    %14 = vector.shape_cast %13 : vector<8xf32> to vector<8x1xf32>
    %15 = vector.broadcast %14 : vector<8x1xf32> to vector<8x16xf32>
    %16 = arith.subf %12, %15 : vector<8x16xf32>
    %17 = math.exp %16 : vector<8x16xf32>
    %cst_15 = arith.constant dense<0.000000e+00> : vector<8xf32>
    %18 = vector.multi_reduction <add>, %17, %cst_15 [1] : vector<8x16xf32> to vector<8xf32>
    %19 = vector.shape_cast %18 : vector<8xf32> to vector<8x1xf32>
    %20 = vector.broadcast %19 : vector<8x1xf32> to vector<8x16xf32>
    %21 = arith.divf %17, %20 : vector<8x16xf32>
    %22 = vector.shape_cast %21 : vector<8x16xf32> to vector<1x8x16xf32>
    %cst_16 = arith.constant dense<0.000000e+00> : vector<1x16xf32>
    %23 = vector.multi_reduction <add>, %22, %cst_16 [1] : vector<1x8x16xf32> to vector<1x16xf32>
    %24 = vector.shape_cast %23 : vector<1x16xf32> to vector<1x1x16xf32>
    %25 = vector.shape_cast %7 : vector<16x16xf32> to vector<1x16x16xf32>
    %26 = vector.broadcast %24 : vector<1x1x16xf32> to vector<1x16x16xf32>
    %27 = arith.mulf %25, %26 : vector<1x16x16xf32>
    %cst_17 = arith.constant dense<0.000000e+00> : vector<1x16xf32>
    %28 = vector.multi_reduction <add>, %27, %cst_17 [2] : vector<1x16x16xf32> to vector<1x16xf32>
    %cst_18 = arith.constant 1.250000e-01 : f32
    %29 = vector.broadcast %cst_18 : f32 to vector<1x16xf32>
    %30 = arith.mulf %28, %29 : vector<1x16xf32>
    %c0_19 = arith.constant 0 : index
    %c0_20 = arith.constant 0 : index
    %31 = vector.load %arg7[%c0_19, %c0_20] : memref<16x17xf32, #tpu.memory_space<vmem>>, vector<16x17xf32>
    %cst_21 = arith.constant dense<0.000000e+00> : vector<1x17xf32>
    %32 = tpu.matmul %30, %31, %cst_21 {dimension_numbers = #tpu.dot_dimension_numbers<[1], [0], [0], [1], [0, 0, 1, 1], [], []>} : vector<1x16xf32>, vector<16x17xf32>, vector<1x17xf32> -> vector<1x17xf32>
    %c0_22 = arith.constant 0 : index
    %c0_23 = arith.constant 0 : index
    %33 = vector.load %arg8[%c0_22, %c0_23] : memref<1x17xf32, #tpu.memory_space<vmem>>, vector<1x17xf32>
    %34 = arith.addf %32, %33 : vector<1x17xf32>
    %35 = vector.extract_strided_slice %34 {offsets = [0, 0], sizes = [1, 16], strides = [1, 1]} : vector<1x17xf32> to vector<1x16xf32>
    %36 = vector.extract_strided_slice %34 {offsets = [0, 16], sizes = [1, 1], strides = [1, 1]} : vector<1x17xf32> to vector<1x1xf32>
    %37 = vector.shape_cast %35 : vector<1x16xf32> to vector<1x16x1xf32>
    %38 = vector.broadcast %37 : vector<1x16x1xf32> to vector<1x16x16xf32>
    %39 = arith.mulf %0, %38 : vector<1x16x16xf32>
    %cst_24 = arith.constant dense<0.000000e+00> : vector<1x16xf32>
    %40 = vector.multi_reduction <add>, %39, %cst_24 [1] : vector<1x16x16xf32> to vector<1x16xf32>
    %41 = vector.broadcast %36 : vector<1x1xf32> to vector<1x16xf32>
    %42 = arith.addf %40, %41 : vector<1x16xf32>
    %43 = arith.negf %42 : vector<1x16xf32>
    %44 = math.exp %43 : vector<1x16xf32>
    %cst_25 = arith.constant 1.000000e+00 : f32
    %45 = vector.broadcast %cst_25 : f32 to vector<1x16xf32>
    %46 = arith.addf %45, %44 : vector<1x16xf32>
    %47 = arith.divf %45, %46 : vector<1x16xf32>
    %48 = vector.shape_cast %47 : vector<1x16xf32> to vector<1x1x16xf32>
    %cst_26 = arith.constant 1.000000e+00 : f32
    %49 = vector.broadcast %cst_26 : f32 to vector<1x1x16xf32>
    %50 = arith.addf %49, %48 : vector<1x1x16xf32>
    %51 = vector.broadcast %50 : vector<1x1x16xf32> to vector<1x16x16xf32>
    %52 = arith.mulf %0, %51 : vector<1x16x16xf32>
    %cst_27 = arith.constant 0.000000e+00 : f32
    %53 = vector.broadcast %cst_27 : f32 to vector<1x16x16xf32>
    %54 = arith.maximumf %52, %53 : vector<1x16x16xf32>
    %c0_28 = arith.constant 0 : index
    %c0_29 = arith.constant 0 : index
    %c0_30 = arith.constant 0 : index
    %55 = vector.load %arg9[%c0_28, %c0_29, %c0_30] : memref<1x16x16xf32, #tpu.memory_space<vmem>>, vector<1x16x16xf32>
    tpu.vector_store %arg9[%c0_28, %c0_29, %c0_30], %54 {strides = array<i32>} : memref<1x16x16xf32, #tpu.memory_space<vmem>>, vector<1x16x16xf32>,
    return
  }
  func.func @transform_0(%arg0: i32) -> (i32, i32, i32) {
    %c0_i32 = arith.constant 0 : i32
    %c0_i32_0 = arith.constant 0 : i32
    %c0_i32_1 = arith.constant 0 : i32
    return %arg0, %c0_i32, %c0_i32_0 : i32, i32, i32
  }
  func.func @transform_1(%arg0: i32) -> (i32, i32, i32) {
    %c0_i32 = arith.constant 0 : i32
    %c0_i32_0 = arith.constant 0 : i32
    %c0_i32_1 = arith.constant 0 : i32
    return %arg0, %c0_i32, %c0_i32_0 : i32, i32, i32
  }
  func.func @transform_2(%arg0: i32) -> (i32, i32) {
    %c0_i32 = arith.constant 0 : i32
    %c0_i32_0 = arith.constant 0 : i32
    %c0_i32_1 = arith.constant 0 : i32
    return %c0_i32, %c0_i32_0 : i32, i32
  }
  func.func @transform_3(%arg0: i32) -> (i32, i32) {
    %c0_i32 = arith.constant 0 : i32
    %c0_i32_0 = arith.constant 0 : i32
    %c0_i32_1 = arith.constant 0 : i32
    return %c0_i32, %c0_i32_0 : i32, i32
  }
  func.func @transform_4(%arg0: i32) -> (i32, i32) {
    %c0_i32 = arith.constant 0 : i32
    %c0_i32_0 = arith.constant 0 : i32
    %c0_i32_1 = arith.constant 0 : i32
    return %c0_i32, %c0_i32_0 : i32, i32
  }
  func.func @transform_5(%arg0: i32) -> (i32, i32) {
    %c0_i32 = arith.constant 0 : i32
    %c0_i32_0 = arith.constant 0 : i32
    %c0_i32_1 = arith.constant 0 : i32
    return %c0_i32, %c0_i32_0 : i32, i32
  }
  func.func @transform_6(%arg0: i32) -> (i32, i32) {
    %c0_i32 = arith.constant 0 : i32
    %c0_i32_0 = arith.constant 0 : i32
    %c0_i32_1 = arith.constant 0 : i32
    return %c0_i32, %c0_i32_0 : i32, i32
  }
  func.func @transform_7(%arg0: i32) -> (i32, i32) {
    %c0_i32 = arith.constant 0 : i32
    %c0_i32_0 = arith.constant 0 : i32
    %c0_i32_1 = arith.constant 0 : i32
    return %c0_i32, %c0_i32_0 : i32, i32
  }
  func.func @transform_8(%arg0: i32) -> (i32, i32, i32) {
    %c0_i32 = arith.constant 0 : i32
    %c0_i32_0 = arith.constant 0 : i32
    %c0_i32_1 = arith.constant 0 : i32
    return %arg0, %c0_i32, %c0_i32_0 : i32, i32, i32
  }
}

</mosaic_0001>

<llo_original>
// kernel: tpu_custom_call.1
$region0: #{tpu_custom_call.1}
  #allocation0 [shape = 'u32[]', space=smem, size = 0x4, offset = 0x4, fixed_abs, tag = 'smem constant byte address 0x4 - core index']
  #allocation1 [shape = 'u32[144,128]{1,0:T(1,128)}', space=vmem, size = 0x12000, scoped, tag = 'internal scratch']
  %s0 = inlined_call_operand.hbm [shape: f32[2,16,16], index: 0, kind: input, shape index: {}]
  %s1 = inlined_call_operand.hbm [shape: f32[2,16,16], index: 1, kind: input, shape index: {}]
  %s2 = inlined_call_operand.vmem [shape: f32[16,16], index: 2, kind: input, shape index: {}]
  %s3 = inlined_call_operand.vmem [shape: f32[16,1], index: 3, kind: input, shape index: {}]
  %s4 = inlined_call_operand.vmem [shape: f32[8,16], index: 4, kind: input, shape index: {}]
  %s5 = inlined_call_operand.vmem [shape: f32[8,1], index: 5, kind: input, shape index: {}]
  %s6 = inlined_call_operand.vmem [shape: f32[16,17], index: 6, kind: input, shape index: {}]
  %s7 = inlined_call_operand.vmem [shape: f32[1,17], index: 7, kind: input, shape index: {}]
  %s8 = inlined_call_operand.hbm [shape: f32[2,16,16], index: 8, kind: output, shape index: {}]
  %s9 = sld [smem:[#allocation0]]
  $region73: #{tpu_custom_call.1} parent=0
    _
  %s11 = ssub.s32 1, %s9
  %s12 = scalar_select 0, %s11, %s9
  $region1: #{tpu_custom_call.1} parent=0
    #allocation2 [shape = 'u8[16384]{0}', space=vmem, size = 0x4000, scoped, tag = 'input window, operand 0']
    #allocation3 [shape = 's32[2]{0}', space=sflag, size = 0x8, scoped, tag = 'scoped memory for tpu_custom_call.1']
    #allocation4 [shape = 's32[2]{0}', space=sflag, size = 0x8, scoped, tag = 'scoped memory for tpu_custom_call.1']
    #allocation5 [shape = 'u8[16384]{0}', space=vmem, size = 0x4000, scoped, tag = 'input window, operand 1']
    #allocation6 [shape = 's32[2]{0}', space=sflag, size = 0x8, scoped, tag = 'scoped memory for tpu_custom_call.1']
    #allocation7 [shape = 'u8[16384]{0}', space=vmem, size = 0x4000, scoped, tag = 'output window, operand 0']
    %13 = vsyncpa [#allocation3], 0
    %s14 = scalar_lea.sflag [#allocation3], 1
    %15 = vsyncpa %s14, 0
    %16 = vsyncpa [#allocation6], 0
    %s17 = scalar_lea.sflag [#allocation6], 1
    %18 = vsyncpa %s17, 0
    %19 = vsyncpa [#allocation4], 0
    %s20 = scalar_lea.sflag [#allocation4], 1
    %21 = vsyncpa %s20, 0
    loop: start=0, step=1, limit=4
    $region2: #{tpu_custom_call.1} parent=1 // loop_pre_header
      _
    $region3: #{tpu_custom_call.1} parent=1 // loop_header
      %s23 = sphi 0, %s27
      %p24 = scmp.ge.s32.totalorder %s23, 4
      %s33 = sphi 0, %s35
      %s36 = sphi 0, %s33
      %s37 = sphi 0, %s36
      %s53 = sphi 0, %s37
      %s59 = sphi 0, %s61
      %s62 = sphi 0, %s59
      %s63 = sphi 0, %s62
      %s79 = sphi 0, %s63
      %s83 = sphi 0, %s83
      %s85 = sphi 0, %s83
      %s86 = sphi 0, %s85
      %s100 = sphi 0, %s86
      %s104 = sphi 0, %s104
      %s106 = sphi 0, %s104
      %s107 = sphi 0, %s106
      %s121 = sphi 0, %s107
      %s125 = sphi 0, %s125
      %s127 = sphi 0, %s125
      %s128 = sphi 0, %s127
      %s142 = sphi 0, %s128
      %s146 = sphi 0, %s146
      %s148 = sphi 0, %s146
      %s149 = sphi 0, %s148
      %s163 = sphi 0, %s149
      %s167 = sphi 0, %s167
      %s169 = sphi 0, %s167
      %s170 = sphi 0, %s169
      %s184 = sphi 0, %s170
      %s188 = sphi 0, %s188
      %s190 = sphi 0, %s188
      %s191 = sphi 0, %s190
      %s205 = sphi 0, %s191
      %s211 = sphi 0, %s213
      %s214 = sphi 0, %s211
      %s215 = sphi 0, %s214
      %s231 = sphi 0, %s215
    $region4: #{tpu_custom_call.1} parent=1 // loop_header_branch
      %26 = sbr.rel (%p24) target = $region8
    $region5: #{tpu_custom_call.1} parent=1 // loop_body
      %s28 = ssub.s32 %s23, 1
      %s29 = ssub.s32 %s23, 2
      %s30 = sadd.s32 %s23, 1
      %s31 = ssub.s32 %s23, %s30
      %p32 = scmp.eq.s32.totalorder %s31, 0
      %s34 = sadd.s32 %s33, 1
      %s35 = scalar_select %p32, %s33, %s34
      %p38 = pneg %p32
      %p39 = scmp.eq.s32.totalorder %s23, 1
      %p40 = por %p38, %p39
      %p41 = scmp.ne.s32.totalorder %s33, %s36
      %p42 = scmp.eq.s32.totalorder %s23, 0
      %p43 = por %p41, %p42
      %p44 = scmp.ne.s32.totalorder %s33, %s36
      %p45 = scmp.eq.s32.totalorder %s28, 1
      %p46 = por %p44, %p45
      %p47 = scmp.ne.s32.totalorder %s36, %s37
      %p48 = scmp.eq.s32.totalorder %s28, 0
      %p49 = por %p47, %p48
      %p50 = scmp.ne.s32.totalorder %s36, %s37
      %p51 = scmp.eq.s32.totalorder %s29, 1
      %p52 = por %p50, %p51
      %p54 = scmp.ne.s32.totalorder %s37, %s53
      %p55 = scmp.eq.s32.totalorder %s29, 0
      %p56 = por %p54, %p55
      %s57 = ssub.s32 %s23, %s30
      %p58 = scmp.eq.s32.totalorder %s57, 0
      %s60 = sadd.s32 %s59, 1
      %s61 = scalar_select %p58, %s59, %s60
      %p64 = pneg %p58
      %p65 = scmp.eq.s32.totalorder %s23, 1
      %p66 = por %p64, %p65
      %p67 = scmp.ne.s32.totalorder %s59, %s62
      %p68 = scmp.eq.s32.totalorder %s23, 0
      %p69 = por %p67, %p68
      %p70 = scmp.ne.s32.totalorder %s59, %s62
      %p71 = scmp.eq.s32.totalorder %s28, 1
      %p72 = por %p70, %p71
      %p73 = scmp.ne.s32.totalorder %s62, %s63
      %p74 = scmp.eq.s32.totalorder %s28, 0
      %p75 = por %p73, %p74
      %p76 = scmp.ne.s32.totalorder %s62, %s63
      %p77 = scmp.eq.s32.totalorder %s29, 1
      %p78 = por %p76, %p77
      %p80 = scmp.ne.s32.totalorder %s63, %s79
      %p81 = scmp.eq.s32.totalorder %s29, 0
      %p82 = por %p80, %p81
      %s84 = sadd.s32 %s83, 1
      %p87 = scmp.eq.s32.totalorder %s23, 1
      %p88 = scmp.ne.s32.totalorder %s83, %s85
      %p89 = scmp.eq.s32.totalorder %s23, 0
      %p90 = por %p88, %p89
      %p91 = scmp.ne.s32.totalorder %s83, %s85
      %p92 = scmp.eq.s32.totalorder %s28, 1
      %p93 = por %p91, %p92
      %p94 = scmp.ne.s32.totalorder %s85, %s86
      %p95 = scmp.eq.s32.totalorder %s28, 0
      %p96 = por %p94, %p95
      %p97 = scmp.ne.s32.totalorder %s85, %s86
      %p98 = scmp.eq.s32.totalorder %s29, 1
      %p99 = por %p97, %p98
      %p101 = scmp.ne.s32.totalorder %s86, %s100
      %p102 = scmp.eq.s32.totalorder %s29, 0
      %p103 = por %p101, %p102
      %s105 = sadd.s32 %s104, 1
      %p108 = scmp.eq.s32.totalorder %s23, 1
      %p109 = scmp.ne.s32.totalorder %s104, %s106
      %p110 = scmp.eq.s32.totalorder %s23, 0
      %p111 = por %p109, %p110
      %p112 = scmp.ne.s32.totalorder %s104, %s106
      %p113 = scmp.eq.s32.totalorder %s28, 1
      %p114 = por %p112, %p113
      %p115 = scmp.ne.s32.totalorder %s106, %s107
      %p116 = scmp.eq.s32.totalorder %s28, 0
      %p117 = por %p115, %p116
      %p118 = scmp.ne.s32.totalorder %s106, %s107
      %p119 = scmp.eq.s32.totalorder %s29, 1
      %p120 = por %p118, %p119
      %p122 = scmp.ne.s32.totalorder %s107, %s121
      %p123 = scmp.eq.s32.totalorder %s29, 0
      %p124 = por %p122, %p123
      %s126 = sadd.s32 %s125, 1
      %p129 = scmp.eq.s32.totalorder %s23, 1
      %p130 = scmp.ne.s32.totalorder %s125, %s127
      %p131 = scmp.eq.s32.totalorder %s23, 0
      %p132 = por %p130, %p131
      %p133 = scmp.ne.s32.totalorder %s125, %s127
      %p134 = scmp.eq.s32.totalorder %s28, 1
      %p135 = por %p133, %p134
      %p136 = scmp.ne.s32.totalorder %s127, %s128
      %p137 = scmp.eq.s32.totalorder %s28, 0
      %p138 = por %p136, %p137
      %p139 = scmp.ne.s32.totalorder %s127, %s128
      %p140 = scmp.eq.s32.totalorder %s29, 1
      %p141 = por %p139, %p140
      %p143 = scmp.ne.s32.totalorder %s128, %s142
      %p144 = scmp.eq.s32.totalorder %s29, 0
      %p145 = por %p143, %p144
      %s147 = sadd.s32 %s146, 1
      %p150 = scmp.eq.s32.totalorder %s23, 1
      %p151 = scmp.ne.s32.totalorder %s146, %s148
      %p152 = scmp.eq.s32.totalorder %s23, 0
      %p153 = por %p151, %p152
      %p154 = scmp.ne.s32.totalorder %s146, %s148
      %p155 = scmp.eq.s32.totalorder %s28, 1
      %p156 = por %p154, %p155
      %p157 = scmp.ne.s32.totalorder %s148, %s149
      %p158 = scmp.eq.s32.totalorder %s28, 0
      %p159 = por %p157, %p158
      %p160 = scmp.ne.s32.totalorder %s148, %s149
      %p161 = scmp.eq.s32.totalorder %s29, 1
      %p162 = por %p160, %p161
      %p164 = scmp.ne.s32.totalorder %s149, %s163
      %p165 = scmp.eq.s32.totalorder %s29, 0
      %p166 = por %p164, %p165
      %s168 = sadd.s32 %s167, 1
      %p171 = scmp.eq.s32.totalorder %s23, 1
      %p172 = scmp.ne.s32.totalorder %s167, %s169
      %p173 = scmp.eq.s32.totalorder %s23, 0
      %p174 = por %p172, %p173
      %p175 = scmp.ne.s32.totalorder %s167, %s169
      %p176 = scmp.eq.s32.totalorder %s28, 1
      %p177 = por %p175, %p176
      %p178 = scmp.ne.s32.totalorder %s169, %s170
      %p179 = scmp.eq.s32.totalorder %s28, 0
      %p180 = por %p178, %p179
      %p181 = scmp.ne.s32.totalorder %s169, %s170
      %p182 = scmp.eq.s32.totalorder %s29, 1
      %p183 = por %p181, %p182
      %p185 = scmp.ne.s32.totalorder %s170, %s184
      %p186 = scmp.eq.s32.totalorder %s29, 0
      %p187 = por %p185, %p186
      %s189 = sadd.s32 %s188, 1
      %p192 = scmp.eq.s32.totalorder %s23, 1
      %p193 = scmp.ne.s32.totalorder %s188, %s190
      %p194 = scmp.eq.s32.totalorder %s23, 0
      %p195 = por %p193, %p194
      %p196 = scmp.ne.s32.totalorder %s188, %s190
      %p197 = scmp.eq.s32.totalorder %s28, 1
      %p198 = por %p196, %p197
      %p199 = scmp.ne.s32.totalorder %s190, %s191
      %p200 = scmp.eq.s32.totalorder %s28, 0
      %p201 = por %p199, %p200
      %p202 = scmp.ne.s32.totalorder %s190, %s191
      %p203 = scmp.eq.s32.totalorder %s29, 1
      %p204 = por %p202, %p203
      %p206 = scmp.ne.s32.totalorder %s191, %s205
      %p207 = scmp.eq.s32.totalorder %s29, 0
      %p208 = por %p206, %p207
      %s209 = ssub.s32 %s23, %s30
      %p210 = scmp.eq.s32.totalorder %s209, 0
      %s212 = sadd.s32 %s211, 1
      %s213 = scalar_select %p210, %s211, %s212
      %p216 = pneg %p210
      %p217 = scmp.eq.s32.totalorder %s23, 1
      %p218 = por %p216, %p217
      %p219 = scmp.ne.s32.totalorder %s211, %s214
      %p220 = scmp.eq.s32.totalorder %s23, 0
      %p221 = por %p219, %p220
      %p222 = scmp.ne.s32.totalorder %s211, %s214
      %p223 = scmp.eq.s32.totalorder %s28, 1
      %p224 = por %p222, %p223
      %p225 = scmp.ne.s32.totalorder %s214, %s215
      %p226 = scmp.eq.s32.totalorder %s28, 0
      %p227 = por %p225, %p226
      %p228 = scmp.ne.s32.totalorder %s214, %s215
      %p229 = scmp.eq.s32.totalorder %s29, 1
      %p230 = por %p228, %p229
      %p232 = scmp.ne.s32.totalorder %s215, %s231
      %p233 = scmp.eq.s32.totalorder %s29, 0
      %p234 = por %p232, %p233
      %p235 = scmp.le.s32.totalorder 1, %s23
      %p236 = scmp.lt.s32.totalorder %s23, 3
      %p237 = pnand %p235, %p236
      %p238 = pneg %p237
      // Predicated region
      $region9: #{tpu_custom_call.1} parent=5 // pred_check
        _
      $region10: #{tpu_custom_call.1} parent=5 // pred_check_branch
        %240 = sbr.rel (%p237) target = $region12
      $region11: #{tpu_custom_call.1} parent=5 // pred_region
        %s241 = ssub.s32 %s23, 1
        // Predicated region
        $region13: #{tpu_custom_call.1} parent=11 // pred_check
          %p242 = pneg %p96
        $region14: #{tpu_custom_call.1} parent=11 // pred_check_branch
          %244 = sbr.rel (%p242) target = $region16
        $region15: #{tpu_custom_call.1} parent=11 // pred_region
          _
        $region16: #{tpu_custom_call.1} parent=11 // pred_fallthru
          _
        // Predicated region
        $region17: #{tpu_custom_call.1} parent=11 // pred_check
          %p245 = pneg %p117
        $region18: #{tpu_custom_call.1} parent=11 // pred_check_branch
          %247 = sbr.rel (%p245) target = $region20
        $region19: #{tpu_custom_call.1} parent=11 // pred_region
          _
        $region20: #{tpu_custom_call.1} parent=11 // pred_fallthru
          _
        // Predicated region
        $region21: #{tpu_custom_call.1} parent=11 // pred_check
          %p248 = pneg %p138
        $region22: #{tpu_custom_call.1} parent=11 // pred_check_branch
          %250 = sbr.rel (%p248) target = $region24
        $region23: #{tpu_custom_call.1} parent=11 // pred_region
          _
        $region24: #{tpu_custom_call.1} parent=11 // pred_fallthru
          _
        // Predicated region
        $region25: #{tpu_custom_call.1} parent=11 // pred_check
          %p251 = pneg %p159
        $region26: #{tpu_custom_call.1} parent=11 // pred_check_branch
          %253 = sbr.rel (%p251) target = $region28
        $region27: #{tpu_custom_call.1} parent=11 // pred_region
          _
        $region28: #{tpu_custom_call.1} parent=11 // pred_fallthru
          _
        // Predicated region
        $region29: #{tpu_custom_call.1} parent=11 // pred_check
          %p254 = pneg %p180
        $region30: #{tpu_custom_call.1} parent=11 // pred_check_branch
          %256 = sbr.rel (%p254) target = $region32
        $region31: #{tpu_custom_call.1} parent=11 // pred_region
          _
        $region32: #{tpu_custom_call.1} parent=11 // pred_fallthru
          _
        // Predicated region
        $region33: #{tpu_custom_call.1} parent=11 // pred_check
          %p257 = pneg %p201
        $region34: #{tpu_custom_call.1} parent=11 // pred_check_branch
          %259 = sbr.rel (%p257) target = $region36
        $region35: #{tpu_custom_call.1} parent=11 // pred_region
          _
        $region36: #{tpu_custom_call.1} parent=11 // pred_fallthru
          _
      $region12: #{tpu_custom_call.1} parent=5 // pred_fallthru
        _
      %p260 = scmp.lt.s32.totalorder %s23, 2
      // Predicated region
      $region37: #{tpu_custom_call.1} parent=5 // pred_check
        %p261 = pneg %p260
      $region38: #{tpu_custom_call.1} parent=5 // pred_check_branch
        %263 = sbr.rel (%p261) target = $region40
      $region39: #{tpu_custom_call.1} parent=5 // pred_region
        // Predicated region
        $region41: #{tpu_custom_call.1} parent=39 // pred_check
          %p264 = pneg %p43
        $region42: #{tpu_custom_call.1} parent=39 // pred_check_branch
          %266 = sbr.rel (%p264) target = $region44
        $region43: #{tpu_custom_call.1} parent=39 // pred_region
          %s267 = sand.u32 %s33, 1
          %s268 = scalar_lea.sflag [#allocation3], %s267
          %s269 = sand.u32 %s33, 1
          %s270 = smul.addr %s269, 16
          %s271 = scalar_lea.vmem [#allocation2], %s270
          %s273 = ssub.s32 256, 256
          %274 = vsyncadd %s268, %s273
          %s275 = smul.addr %s23, 2
          %s276 = smul.addr %s275, 128
          %s277 = scalar_lea.hbm %s0, %s276
          %s278 = sshll.u32 %s271, 4
          %s279 = int_to_ptr.vmem [resolvable:$true] %s278
          %284 = dma.hbm_to_vmem [thread:$0]  %s277, 256, %s279, %s268, 128, 128, 8
        $region44: #{tpu_custom_call.1} parent=39 // pred_fallthru
          _
        // Predicated region
        $region45: #{tpu_custom_call.1} parent=39 // pred_check
          %p285 = pneg %p69
        $region46: #{tpu_custom_call.1} parent=39 // pred_check_branch
          %287 = sbr.rel (%p285) target = $region48
        $region47: #{tpu_custom_call.1} parent=39 // pred_region
          %s288 = sand.u32 %s59, 1
          %s289 = scalar_lea.sflag [#allocation6], %s288
          %s290 = sand.u32 %s59, 1
          %s291 = smul.addr %s290, 16
          %s292 = scalar_lea.vmem [#allocation5], %s291
          %s294 = ssub.s32 256, 256
          %295 = vsyncadd %s289, %s294
          %s296 = smul.addr %s23, 2
          %s297 = smul.addr %s296, 128
          %s298 = scalar_lea.hbm %s1, %s297
          %s299 = sshll.u32 %s292, 4
          %s300 = int_to_ptr.vmem [resolvable:$true] %s299
          %305 = dma.hbm_to_vmem [thread:$0]  %s298, 256, %s300, %s289, 128, 128, 8
        $region48: #{tpu_custom_call.1} parent=39 // pred_fallthru
          _
      $region40: #{tpu_custom_call.1} parent=5 // pred_fallthru
        _
      %p306 = scmp.le.s32.totalorder 1, %s23
      %p307 = scmp.lt.s32.totalorder %s23, 3
      %p308 = pnand %p306, %p307
      %p309 = pneg %p308
      // Predicated region
      $region49: #{tpu_custom_call.1} parent=5 // pred_check
        _
      $region50: #{tpu_custom_call.1} parent=5 // pred_check_branch
        %311 = sbr.rel (%p308) target = $region52
      $region51: #{tpu_custom_call.1} parent=5 // pred_region
        %s312 = ssub.s32 %s23, 1
        %s313 = sand.u32 %s36, 1
        %s314 = scalar_lea.sflag [#allocation3], %s313
        %s315 = sand.u32 %s36, 1
        %s316 = smul.addr %s315, 16
        %s317 = scalar_lea.vmem [#allocation2], %s316
        // Predicated region
        $region53: #{tpu_custom_call.1} parent=51 // pred_check
          %p318 = pneg %p49
        $region54: #{tpu_custom_call.1} parent=51 // pred_check_branch
          %320 = sbr.rel (%p318) target = $region56
        $region55: #{tpu_custom_call.1} parent=51 // pred_region
          %321 = dma.done %s314, 256
        $region56: #{tpu_custom_call.1} parent=51 // pred_fallthru
          _
        %s322 = sand.u32 %s62, 1
        %s323 = scalar_lea.sflag [#allocation6], %s322
        %s324 = sand.u32 %s62, 1
        %s325 = smul.addr %s324, 16
        %s326 = scalar_lea.vmem [#allocation5], %s325
        // Predicated region
        $region57: #{tpu_custom_call.1} parent=51 // pred_check
          %p327 = pneg %p75
        $region58: #{tpu_custom_call.1} parent=51 // pred_check_branch
          %329 = sbr.rel (%p327) target = $region60
        $region59: #{tpu_custom_call.1} parent=51 // pred_region
          %330 = dma.done %s323, 256
        $region60: #{tpu_custom_call.1} parent=51 // pred_fallthru
          _
        %s331 = sand.u32 %s36, 1
        %s332 = scalar_lea.sflag [#allocation3], %s331
        %s333 = sand.u32 %s36, 1
        %s334 = smul.addr %s333, 16
        %s335 = scalar_lea.vmem [#allocation2], %s334
        %p336 = pneg %p49
        %p337 = pneg %p46
        %s338 = sand.u32 %s62, 1
        %s339 = scalar_lea.sflag [#allocation6], %s338
        %s340 = sand.u32 %s62, 1
        %s341 = smul.addr %s340, 16
        %s342 = scalar_lea.vmem [#allocation5], %s341
        %p343 = pneg %p75
        %p344 = pneg %p72
        %p345 = pneg %p96
        %p346 = pneg %p93
        %p347 = pneg %p117
        %p348 = pneg %p114
        %p349 = pneg %p138
        %p350 = pneg %p135
        %p351 = pneg %p159
        %p352 = pneg %p156
        %p353 = pneg %p180
        %p354 = pneg %p177
        %p355 = pneg %p201
        %p356 = pneg %p198
        %p357 = pneg %p227
        %p358 = pneg %p224
        %s359 = sand.u32 %s214, 1
        %s360 = scalar_lea.sflag [#allocation4], %s359
        %s361 = sand.u32 %s214, 1
        %s362 = smul.addr %s361, 16
        %s363 = scalar_lea.vmem [#allocation7], %s362
        %v364 = vld [vmem:[%s326] sm:$0xff]
        %v365 = vld [vmem:[%s326 + $0x8] sm:$0xff]
        %v366 = vld [vmem:[%s317] sm:$0xff]
        %v367 = vld [vmem:[%s317 + $0x8] sm:$0xff]
        %v368 = vld [vmem:[%s2] sm:$0xff]
        %v369 = vld [vmem:[%s2 + $0x8] sm:$0xff]
        %v370 = vld [vmem:[%s3] sm:$0xff]
        %v371 = vld [vmem:[%s3 + $0x8] sm:$0xff]
        %373 = vset.pattern.permute.xlu0 0
        %374 = vperm.xlu0 %373, %v370
        %v375 = vpop.permute.xlu0 %374
        %378 = vset.pattern.permute.xlu0 0
        %379 = vperm.xlu0 %378, %v371
        %v380 = vpop.permute.xlu0 %379
        %vm382 = vcmask 130048
        %v384 = vsel %vm382, %v368, 0
        %v387 = vsel %vm382, %v369, 0
        %389 = vmatprep.subr.mxu0 0.0
        %390 = vmatpush1.msra.mxu0 %v366
        %391 = vmatprep.subr.mxu0 0.0
        %392 = vmatpush1.msra.mxu0 %v367
        %393 = vmatprep.subr.mxu0 0.0
        %394 = vmatpush1.msra.mxu0 0.0
        %395 = vmatprep.subr.mxu0 0.0
        %396 = vmatpush1.msra.mxu0 0.0
        %397 = vmatprep.subr.mxu0 0.0
        %398 = vmatpush1.msra.mxu0 0.0
        %399 = vmatprep.subr.mxu0 0.0
        %400 = vmatpush1.msra.mxu0 0.0
        %401 = vmatprep.subr.mxu0 0.0
        %402 = vmatpush1.msra.mxu0 0.0
        %403 = vmatprep.subr.mxu0 0.0
        %404 = vmatpush1.msra.mxu0 0.0
        %405 = vmatprep.subr.mxu0 0.0
        %406 = vmatpush1.msra.mxu0 0.0
        %407 = vmatprep.subr.mxu0 0.0
        %408 = vmatpush1.msra.mxu0 0.0
        %409 = vmatprep.subr.mxu0 0.0
        %410 = vmatpush1.msra.mxu0 0.0
        %411 = vmatprep.subr.mxu0 0.0
        %412 = vmatpush1.msra.mxu0 0.0
        %413 = vmatprep.subr.mxu0 0.0
        %414 = vmatpush1.msra.mxu0 0.0
        %415 = vmatprep.subr.mxu0 0.0
        %416 = vmatpush1.msra.mxu0 0.0
        %417 = vmatprep.subr.mxu0 0.0
        %418 = vmatpush1.msra.mxu0 0.0
        %419 = vmatprep.subr.mxu0 0.0
        %420 = vmatpush1.msra.mxu0 0.0
        %421 = vmatprep.subr.mxu0 0.0
        %422 = vmatpush1.msra.mxu0 0.0
        %423 = vmatprep.subr.mxu0 0.0
        %424 = vmatpush1.msra.mxu0 0.0
        %425 = vmatprep.subr.mxu0 0.0
        %426 = vmatpush1.msra.mxu0 0.0
        %427 = vmatprep.subr.mxu0 0.0
        %428 = vmatpush1.msra.mxu0 0.0
        %429 = vmatprep.subr.mxu0 0.0
        %430 = vmatpush1.msra.mxu0 0.0
        %431 = vmatprep.subr.mxu0 0.0
        %432 = vmatpush1.msra.mxu0 0.0
        %433 = vmatprep.subr.mxu0 0.0
        %434 = vmatpush1.msra.mxu0 0.0
        %435 = vmatprep.subr.mxu0 0.0
        %436 = vmatpush1.msra.mxu0 0.0
        %437 = vmatprep.subr.mxu0 0.0
        %438 = vmatpush1.msra.mxu0 0.0
        %439 = vmatprep.subr.mxu0 0.0
        %440 = vmatpush1.msra.mxu0 0.0
        %441 = vmatprep.subr.mxu0 0.0
        %442 = vmatpush1.msra.mxu0 0.0
        %443 = vmatprep.subr.mxu0 0.0
        %444 = vmatpush1.msra.mxu0 0.0
        %445 = vmatprep.subr.mxu0 0.0
        %446 = vmatpush1.msra.mxu0 0.0
        %447 = vmatprep.subr.mxu0 0.0
        %448 = vmatpush1.msra.mxu0 0.0
        %449 = vmatprep.subr.mxu0 0.0
        %450 = vmatpush1.msra.mxu0 0.0
        %451 = vmatprep.subr.mxu0 0.0
        %452 = vmatpush1.msra.mxu0 0.0
        %453 = vmatprep.mubr.f32.mxu0 0.0
        %454 = vmatmul.mubr.f32.gmra.mrb[0].mxu0 %v384
        %v455 = vpop.f32.mrb[0].mxu0
        %v456 = vadd.f32 %v375, %v455
        %v457 = vpop.f32.mrb[0].mxu0
        %458 = vmatprep.mubr.f32.mxu0 0.0
        %459 = vmatmul.mubr.f32.gmra.mrb[0].mxu0 %v387
        %v460 = vpop.f32.mrb[0].mxu0
        %v461 = vadd.f32 %v380, %v460
        %v462 = vpop.f32.mrb[0].mxu0
        %463 = vdwg.mxu0
        %v464 = vld [vmem:[%s4] sm:$0xff]
        %v465 = vld [vmem:[%s5] sm:$0xff]
        %467 = vset.pattern.permute.xlu0 0
        %468 = vperm.xlu0 %467, %v465
        %v469 = vpop.permute.xlu0 %468
        %v472 = vsel %vm382, %v464, 0
        %474 = vmatprep.subr.mxu0 0.0
        %475 = vmatpush1.msra.mxu0 %v366
        %476 = vmatprep.subr.mxu0 0.0
        %477 = vmatpush1.msra.mxu0 %v367
        %478 = vmatprep.subr.mxu0 0.0
        %479 = vmatpush1.msra.mxu0 0.0
        %480 = vmatprep.subr.mxu0 0.0
        %481 = vmatpush1.msra.mxu0 0.0
        %482 = vmatprep.subr.mxu0 0.0
        %483 = vmatpush1.msra.mxu0 0.0
        %484 = vmatprep.subr.mxu0 0.0
        %485 = vmatpush1.msra.mxu0 0.0
        %486 = vmatprep.subr.mxu0 0.0
        %487 = vmatpush1.msra.mxu0 0.0
        %488 = vmatprep.subr.mxu0 0.0
        %489 = vmatpush1.msra.mxu0 0.0
        %490 = vmatprep.subr.mxu0 0.0
        %491 = vmatpush1.msra.mxu0 0.0
        %492 = vmatprep.subr.mxu0 0.0
        %493 = vmatpush1.msra.mxu0 0.0
        %494 = vmatprep.subr.mxu0 0.0
        %495 = vmatpush1.msra.mxu0 0.0
        %496 = vmatprep.subr.mxu0 0.0
        %497 = vmatpush1.msra.mxu0 0.0
        %498 = vmatprep.subr.mxu0 0.0
        %499 = vmatpush1.msra.mxu0 0.0
        %500 = vmatprep.subr.mxu0 0.0
        %501 = vmatpush1.msra.mxu0 0.0
        %502 = vmatprep.subr.mxu0 0.0
        %503 = vmatpush1.msra.mxu0 0.0
        %504 = vmatprep.subr.mxu0 0.0
        %505 = vmatpush1.msra.mxu0 0.0
        %506 = vmatprep.subr.mxu0 0.0
        %507 = vmatpush1.msra.mxu0 0.0
        %508 = vmatprep.subr.mxu0 0.0
        %509 = vmatpush1.msra.mxu0 0.0
        %510 = vmatprep.subr.mxu0 0.0
        %511 = vmatpush1.msra.mxu0 0.0
        %512 = vmatprep.subr.mxu0 0.0
        %513 = vmatpush1.msra.mxu0 0.0
        %514 = vmatprep.subr.mxu0 0.0
        %515 = vmatpush1.msra.mxu0 0.0
        %516 = vmatprep.subr.mxu0 0.0
        %517 = vmatpush1.msra.mxu0 0.0
        %518 = vmatprep.subr.mxu0 0.0
        %519 = vmatpush1.msra.mxu0 0.0
        %520 = vmatprep.subr.mxu0 0.0
        %521 = vmatpush1.msra.mxu0 0.0
        %522 = vmatprep.subr.mxu0 0.0
        %523 = vmatpush1.msra.mxu0 0.0
        %524 = vmatprep.subr.mxu0 0.0
        %525 = vmatpush1.msra.mxu0 0.0
        %526 = vmatprep.subr.mxu0 0.0
        %527 = vmatpush1.msra.mxu0 0.0
        %528 = vmatprep.subr.mxu0 0.0
        %529 = vmatpush1.msra.mxu0 0.0
        %530 = vmatprep.subr.mxu0 0.0
        %531 = vmatpush1.msra.mxu0 0.0
        %532 = vmatprep.subr.mxu0 0.0
        %533 = vmatpush1.msra.mxu0 0.0
        %534 = vmatprep.subr.mxu0 0.0
        %535 = vmatpush1.msra.mxu0 0.0
        %536 = vmatprep.subr.mxu0 0.0
        %537 = vmatpush1.msra.mxu0 0.0
        %538 = vmatprep.mubr.f32.mxu0 0.0
        %539 = vmatmul.mubr.f32.gmra.mrb[0].mxu0 %v472
        %v540 = vpop.f32.mrb[0].mxu0
        %v541 = vadd.f32 %v469, %v540
        %v542 = vpop.f32.mrb[0].mxu0
        %543 = vdwg.mxu0
        %v544 = vsel %vm382, %v541, -inf
        %545 = vmax.xlane.f32.xlu0 %v544
        %v546 = vpop.xlane.xlu0 %545
        %v547 = vsub.f32 %v541, %v546
        %v548 = vmul.f32 %v547, 1.442695
        %v549 = vpow.pop %v548
        %v550 = vsel %vm382, %v549, 0.0
        %551 = vadd.xlane.f32.xlu0 %v550
        %v552 = vpop.xlane.xlu0 %551
        %v553 = vrcp.pop %v552
        %v554 = vmul.f32 %v549, %v553
        %v555 = vsel %vm382, %v554, 0.0
        %v556 = vrot.slane %v555, 4
        %v557 = vadd.f32 %v555, %v556
        %v558 = vrot.slane %v557, 2
        %v559 = vadd.f32 %v557, %v558
        %v560 = vrot.slane %v559, 1
        %v561 = vadd.f32 %v559, %v560
        %v562 = vmul.f32 %v456, %v561
        %v563 = vmul.f32 %v461, %v561
        %v564 = vsel %vm382, %v562, 0.0
        %565 = vadd.xlane.f32.xlu0 %v564
        %v566 = vpop.xlane.xlu0 %565
        %v567 = vsel %vm382, %v563, 0.0
        %568 = vadd.xlane.f32.xlu0 %v567
        %v569 = vpop.xlane.xlu0 %568
        %v570 = vmul.f32 %v566, 0.125
        %v571 = vmul.f32 %v569, 0.125
        %v572 = vld [vmem:[%s6] sm:$0xff]
        %v573 = vld [vmem:[%s6 + $0x8] sm:$0xff]
        %v574 = vld [vmem:[%s7] sm:$0x1]
        %v577 = vlaneseq
        %v578 = vand.u32 %v577, 127
        %v579 = vlaneseq
        %v580 = vshrl.u32 %v579, 7
        %v581 = vsub.s32 %v578, %v580
        %v582 = vrot.slane %v570, %v581
        %v583 = vadd.s32 %v578, 4294967288
        %v584 = vlaneseq
        %v585 = vshrl.u32 %v584, 7
        %v586 = vsub.s32 %v583, %v585
        %v587 = vrot.slane %v571, %v586
        %vm588 = vcmask 130112
        %v589 = vsel %vm588, %v587, %v582
        %v590 = vsel %vm382, %v589, 0
        %592 = vmatprep.subr.mxu0 0.0
        %593 = vmatpush1.msra.mxu0 %v572
        %594 = vmatprep.subr.mxu0 0.0
        %595 = vmatpush1.msra.mxu0 %v573
        %596 = vmatprep.subr.mxu0 0.0
        %597 = vmatpush1.msra.mxu0 0.0
        %598 = vmatprep.subr.mxu0 0.0
        %599 = vmatpush1.msra.mxu0 0.0
        %600 = vmatprep.subr.mxu0 0.0
        %601 = vmatpush1.msra.mxu0 0.0
        %602 = vmatprep.subr.mxu0 0.0
        %603 = vmatpush1.msra.mxu0 0.0
        %604 = vmatprep.subr.mxu0 0.0
        %605 = vmatpush1.msra.mxu0 0.0
        %606 = vmatprep.subr.mxu0 0.0
        %607 = vmatpush1.msra.mxu0 0.0
        %608 = vmatprep.subr.mxu0 0.0
        %609 = vmatpush1.msra.mxu0 0.0
        %610 = vmatprep.subr.mxu0 0.0
        %611 = vmatpush1.msra.mxu0 0.0
        %612 = vmatprep.subr.mxu0 0.0
        %613 = vmatpush1.msra.mxu0 0.0
        %614 = vmatprep.subr.mxu0 0.0
        %615 = vmatpush1.msra.mxu0 0.0
        %616 = vmatprep.subr.mxu0 0.0
        %617 = vmatpush1.msra.mxu0 0.0
        %618 = vmatprep.subr.mxu0 0.0
        %619 = vmatpush1.msra.mxu0 0.0
        %620 = vmatprep.subr.mxu0 0.0
        %621 = vmatpush1.msra.mxu0 0.0
        %622 = vmatprep.subr.mxu0 0.0
        %623 = vmatpush1.msra.mxu0 0.0
        %624 = vmatprep.subr.mxu0 0.0
        %625 = vmatpush1.msra.mxu0 0.0
        %626 = vmatprep.subr.mxu0 0.0
        %627 = vmatpush1.msra.mxu0 0.0
        %628 = vmatprep.subr.mxu0 0.0
        %629 = vmatpush1.msra.mxu0 0.0
        %630 = vmatprep.subr.mxu0 0.0
        %631 = vmatpush1.msra.mxu0 0.0
        %632 = vmatprep.subr.mxu0 0.0
        %633 = vmatpush1.msra.mxu0 0.0
        %634 = vmatprep.subr.mxu0 0.0
        %635 = vmatpush1.msra.mxu0 0.0
        %636 = vmatprep.subr.mxu0 0.0
        %637 = vmatpush1.msra.mxu0 0.0
        %638 = vmatprep.subr.mxu0 0.0
        %639 = vmatpush1.msra.mxu0 0.0
        %640 = vmatprep.subr.mxu0 0.0
        %641 = vmatpush1.msra.mxu0 0.0
        %642 = vmatprep.subr.mxu0 0.0
        %643 = vmatpush1.msra.mxu0 0.0
        %644 = vmatprep.subr.mxu0 0.0
        %645 = vmatpush1.msra.mxu0 0.0
        %646 = vmatprep.subr.mxu0 0.0
        %647 = vmatpush1.msra.mxu0 0.0
        %648 = vmatprep.subr.mxu0 0.0
        %649 = vmatpush1.msra.mxu0 0.0
        %650 = vmatprep.subr.mxu0 0.0
        %651 = vmatpush1.msra.mxu0 0.0
        %652 = vmatprep.subr.mxu0 0.0
        %653 = vmatpush1.msra.mxu0 0.0
        %654 = vmatprep.subr.mxu0 0.0
        %655 = vmatpush1.msra.mxu0 0.0
        %656 = vmatprep.mubr.f32.mxu0 0.0
        %657 = vmatmul.mubr.f32.gmra.mrb[0].mxu0 %v590
        %v658 = vpop.f32.mrb[0].mxu0
        %v659 = vadd.f32 %v574, %v658
        %v660 = vpop.f32.mrb[0].mxu0
        %661 = vdwg.mxu0
        %v662 = vlaneseq
        %v663 = vshrl.u32 %v662, 7
        %v664 = vsub.s32 0, %v663
        %v665 = vrot.slane %v659, %v664
        %667 = vbcast.lane.b32.xlu0 %v665, 256
        %v668 = vpop.permute.xlu0 %667
        %s670 = sor.u32 256, 8
        %671 = vbcast.lane.b32.xlu0 %v665, %s670
        %v672 = vpop.permute.xlu0 %671
        %v673 = vmul.f32 %v364, %v668
        %v674 = vmul.f32 %v365, %v672
        %v675 = vsel %vm382, %v673, 0.0
        %v676 = vsel %vm382, %v674, 0.0
        %v677 = vadd.f32 %v675, %v676
        %v678 = vrot.slane %v677, 4
        %v679 = vadd.f32 %v677, %v678
        %v680 = vrot.slane %v679, 2
        %v681 = vadd.f32 %v679, %v680
        %v682 = vrot.slane %v681, 1
        %v683 = vadd.f32 %v681, %v682
        %685 = vset.pattern.permute.xlu0 16
        %686 = vperm.xlu0 %685, %v659
        %v687 = vpop.permute.xlu0 %686
        %v689 = vadd.f32 %v683, %v687
        %v690 = vxor.u32 %v689, 2147483648
        %v691 = vmul.f32 %v690, 1.442695
        %v692 = vpow.pop %v691
        %v693 = vadd.f32 %v692, 1.0
        %v694 = vrcp.pop %v693
        %v695 = vmul.f32 1.0, %v694
        %v696 = vadd.f32 %v695, 1.0
        %v697 = vlaneseq
        %v698 = vshrl.u32 %v697, 7
        %v699 = vsub.s32 0, %v698
        %v700 = vrot.slane %v696, %v699
        %v701 = vmul.f32 %v364, %v700
        %v702 = vmul.f32 %v365, %v700
        %v703 = vmax.f32 %v701, 0.0
        %v704 = vmax.f32 %v702, 0.0
        %705 = vst.msk [vmem:[%s363] sm:$0xff] %vm382, %v703
        %706 = vst.msk [vmem:[%s363 + $0x8] sm:$0xff] %vm382, %v704
        %s707 = sand.u32 %s214, 1
        %s708 = scalar_lea.sflag [#allocation4], %s707
        %s709 = sand.u32 %s214, 1
        %s710 = smul.addr %s709, 16
        %s711 = scalar_lea.vmem [#allocation7], %s710
        // Predicated region
        $region61: #{tpu_custom_call.1} parent=51 // pred_check
          %p712 = pneg %p224
        $region62: #{tpu_custom_call.1} parent=51 // pred_check_branch
          %714 = sbr.rel (%p712) target = $region64
        $region63: #{tpu_custom_call.1} parent=51 // pred_region
          %s716 = ssub.s32 256, 256
          %717 = vsyncadd %s708, %s716
          %s718 = smul.addr %s28, 2
          %s719 = smul.addr %s718, 128
          %s720 = scalar_lea.hbm %s8, %s719
          %s721 = sshll.u32 %s711, 4
          %s722 = int_to_ptr.vmem [resolvable:$true] %s721
          %727 = dma.vmem_to_hbm [thread:$0]  %s722, 256, %s720, %s708, 128, 128, 8
        $region64: #{tpu_custom_call.1} parent=51 // pred_fallthru
          _
      $region52: #{tpu_custom_call.1} parent=5 // pred_fallthru
        _
      %p728 = scmp.le.s32.totalorder 2, %s23
      // Predicated region
      $region65: #{tpu_custom_call.1} parent=5 // pred_check
        %p729 = pneg %p728
      $region66: #{tpu_custom_call.1} parent=5 // pred_check_branch
        %731 = sbr.rel (%p729) target = $region68
      $region67: #{tpu_custom_call.1} parent=5 // pred_region
        %s732 = ssub.s32 %s23, 2
        // Predicated region
        $region69: #{tpu_custom_call.1} parent=67 // pred_check
          %p733 = pneg %p230
        $region70: #{tpu_custom_call.1} parent=67 // pred_check_branch
          %735 = sbr.rel (%p733) target = $region72
        $region71: #{tpu_custom_call.1} parent=67 // pred_region
          %s736 = sand.u32 %s215, 1
          %s737 = scalar_lea.sflag [#allocation4], %s736
          %s738 = sand.u32 %s215, 1
          %s739 = smul.addr %s738, 16
          %s740 = scalar_lea.vmem [#allocation7], %s739
          %741 = dma.done %s737, 256
        $region72: #{tpu_custom_call.1} parent=67 // pred_fallthru
          _
      $region68: #{tpu_custom_call.1} parent=5 // pred_fallthru
        _
    $region6: #{tpu_custom_call.1} parent=1 // loop_footer
      %s27 = sadd.s32 1, %s23
    $region7: #{tpu_custom_call.1} parent=1 // loop_footer_branch
      %22 = sbr.rel target = $region3
    $region8: #{tpu_custom_call.1} parent=1 // loop_exit
      _
    %742 = vsyncpa [#allocation3], 1
    %s743 = scalar_lea.sflag [#allocation3], 1
    %744 = vsyncpa %s743, 1
    %745 = vsyncpa [#allocation6], 1
    %s746 = scalar_lea.sflag [#allocation6], 1
    %747 = vsyncpa %s746, 1
    %748 = vsyncpa [#allocation4], 1
    %s749 = scalar_lea.sflag [#allocation4], 1
    %750 = vsyncpa %s749, 1

</llo_original>
